<compile_context>
chip_gen: v7x
topology: tpu7x:2x2x1
jax: 0.10.0
libtpu: 0.0.40
codegen_flags: <defaults>
</compile_context>

<pallas_src>
import numpy as np
import jax
import jax.numpy as jnp
from jax.experimental import pallas as pl
from jax.experimental.pallas import tpu as pltpu

MAX_TN = 32768  # points per grid step (8 sublanes x 32768 x 4B = 1 MiB/buffer)


def _round_up(x, m):
    return ((x + m - 1) // m) * m


# ----------------------------- Pallas kernel --------------------------------
def _transform_kernel(rt_ref, p_ref, o_ref):
    # rt_ref: (12,) f32 in SMEM -> R row-major in rt[0:9], T in rt[9:12]
    # p_ref : (3, TN) coordinate-major points tile in VMEM
    # out[c, :] = R[0,c]*p[0,:] + R[1,c]*p[1,:] + R[2,c]*p[2,:] + T[c]
    p = p_ref[...]
    p0, p1, p2 = p[0:1, :], p[1:2, :], p[2:3, :]
    rows = []
    for c in range(3):  # static unroll: 9 scalar*vector FMAs, pure VPU work
        rows.append(rt_ref[c] * p0 + rt_ref[3 + c] * p1 +
                    rt_ref[6 + c] * p2 + rt_ref[9 + c])
    o_ref[...] = jnp.concatenate(rows, axis=0).astype(o_ref.dtype)


def _transform_coord_major(points_cm, rt):
    """points_cm: [3, M] f32 (coordinate-major); rt: [12] f32. Returns [3, M]."""
    M = points_cm.shape[1]
    TN = min(MAX_TN, _round_up(M, 128))
    M_pad = _round_up(M, TN)
    if M_pad != M:  # pad fuses with the wrapper transpose under jit
        points_cm = jnp.pad(points_cm, ((0, 0), (0, M_pad - M)))
    out = pl.pallas_call(
        _transform_kernel,
        out_shape=jax.ShapeDtypeStruct((3, M_pad), points_cm.dtype),
        grid=(M_pad // TN,),
        in_specs=[
            pl.BlockSpec(memory_space=pltpu.MemorySpace.SMEM),  # R,T scalars
            pl.BlockSpec((3, TN), lambda i: (0, i)),            # points tile
        ],
        out_specs=pl.BlockSpec((3, TN), lambda i: (0, i)),
        compiler_params=pltpu.CompilerParams(
            dimension_semantics=("parallel",)),  # megacore sharding on v7x
    )(rt, points_cm)
    return out[:, :M]


# --------------------------- se3 helpers (glue) ------------------------------
def se3_exp3(params):
    # TODO(synk): the original code calls se3.exp3 (module not provided);
    # assumed Rodrigues exponential on params[:3] with params[3:] as raw
    # translation (no SE(3) V/Jacobian coupling).
    omega = params[:3]
    t = params[3:]
    theta2 = jnp.sum(omega * omega)
    small = theta2 < 1e-8
    safe_theta2 = jnp.where(small, 1.0, theta2)
    theta = jnp.sqrt(safe_theta2)
    wx, wy, wz = omega[0], omega[1], omega[2]
    K = jnp.array([[0.0, -wz, wy],
                   [wz, 0.0, -wx],
                   [-wy, wx, 0.0]], dtype=params.dtype)
    # Taylor guards keep zero_init / tiny angles numerically clean in f32.
    A = jnp.where(small, 1.0 - theta2 / 6.0, jnp.sin(theta) / theta)
    B = jnp.where(small, 0.5 - theta2 / 24.0,
                  (1.0 - jnp.cos(theta)) / (theta * theta))
    R = jnp.eye(3, dtype=params.dtype) + A * K + B * (K @ K)
    return R, t


# --------------------------- jitted forward passes ---------------------------
@jax.jit
def _forward_fused(params, points, points_neighbors):
    R, T = se3_exp3(params)
    rt = jnp.concatenate([R.reshape(-1), T.reshape(-1)]).astype(jnp.float32)
    p_flat = points.reshape(-1, 3)
    n_flat = points_neighbors.reshape(-1, 3)
    n_pts = p_flat.shape[0]
    # One fused pass over both point sets (shared R, T), coordinate-major.
    all_cm = jnp.concatenate([p_flat, n_flat], axis=0).T        # (3, Mp+Mn)
    out = _transform_coord_major(all_cm, rt).T                  # (Mp+Mn, 3)
    return out[:n_pts].reshape(-1, 3), out[n_pts:].reshape(-1, 9)


@jax.jit
def _forward_points_only(params, points):
    R, T = se3_exp3(params)
    rt = jnp.concatenate([R.reshape(-1), T.reshape(-1)]).astype(jnp.float32)
    p_cm = points.reshape(-1, 3).T
    return _transform_coord_major(p_cm, rt).T.reshape(-1, 3)


# ------------------------------ Module wrapper --------------------------------
class ReconstructionPoint:
    def __init__(self, zero_init=False, seed=0):
        rng = np.random.default_rng(seed)
        if zero_init:
            tp = rng.standard_normal(3)
            tp = tp / np.linalg.norm(tp) * 0.0
            tp_translation = rng.standard_normal(3) * 0.0
        else:
            tp = rng.standard_normal(3)
            tp = tp / np.linalg.norm(tp)
            tp_translation = rng.standard_normal(3) * 0.001
        self.parameters_ = jnp.asarray(
            np.concatenate([0.001 * tp, tp_translation], 0).astype(np.float32))

    def transform(self):
        return se3_exp3(self.parameters_)

    def __call__(self, points, points_neighbors):
        if points_neighbors is None:
            return _forward_points_only(self.parameters_, points), None
        return _forward_fused(self.parameters_, points, points_neighbors)


# ---------------------------------- main --------------------------------------
if __name__ == "__main__":
    key = jax.random.PRNGKey(0)
    k1, k2 = jax.random.split(key)
    B, N = 2, 64
    points = jax.random.normal(k1, (B, N, 3), dtype=jnp.float32)
    # 3 neighbors per point -> reshape(-1, 9) gives (B*N, 9)
    points_neighbors = jax.random.normal(k2, (B, 3 * N, 3), dtype=jnp.float32)

    model = ReconstructionPoint(seed=0)
    up, nb = model(points, points_neighbors)
    up = jax.block_until_ready(up)
    nb = jax.block_until_ready(nb)

    # pure-JAX reference check
    R, T = model.transform()
    up_ref = (points @ R + T.reshape(1, 1, 3)).reshape(-1, 3)
    nb_ref = (points_neighbors @ R + T.reshape(1, 1, 3)).reshape(-1, 9)
    assert up.shape == (B * N, 3) and nb.shape == (B * N, 9)
    np.testing.assert_allclose(np.asarray(up), np.asarray(up_ref), rtol=1e-5, atol=1e-5)
    np.testing.assert_allclose(np.asarray(nb), np.asarray(nb_ref), rtol=1e-5, atol=1e-5)

    print("KERNEL_OK")
</pallas_src>

<mosaic_0001>
module attributes {stable_mosaic.version = 11 : i64} {
  func.func @_transform_kernel(%arg0: i32, %arg1: memref<12xf32, #tpu.memory_space<smem>>, %arg2: memref<3x512xf32, #tpu.memory_space<vmem>>, %arg3: memref<3x512xf32, #tpu.memory_space<vmem>>) attributes {dimension_semantics = [#tpu.dimension_semantics<parallel>], iteration_bounds = array<i64: 1>, scalar_prefetch = 0 : i64, scratch_operands = 0 : i64, tpu.core_type = #tpu.core_type<tc>, window_params = [{transform_indices = @transform_0, window_bounds = array<i64: 12>}, {transform_indices = @transform_1, window_bounds = array<i64: 3, 512>}, {transform_indices = @transform_2, window_bounds = array<i64: 3, 512>}]} {
    %c0 = arith.constant 0 : index
    %c0_0 = arith.constant 0 : index
    %0 = vector.load %arg2[%c0, %c0_0] : memref<3x512xf32, #tpu.memory_space<vmem>>, vector<3x512xf32>
    %1 = vector.extract_strided_slice %0 {offsets = [0, 0], sizes = [1, 512], strides = [1, 1]} : vector<3x512xf32> to vector<1x512xf32>
    %2 = vector.extract_strided_slice %0 {offsets = [1, 0], sizes = [1, 512], strides = [1, 1]} : vector<3x512xf32> to vector<1x512xf32>
    %3 = vector.extract_strided_slice %0 {offsets = [2, 0], sizes = [1, 512], strides = [1, 1]} : vector<3x512xf32> to vector<1x512xf32>
    %c0_1 = arith.constant 0 : index
    %4 = memref.load %arg1[%c0_1] : memref<12xf32, #tpu.memory_space<smem>>
    %5 = vector.broadcast %4 : f32 to vector<1x512xf32>
    %6 = arith.mulf %5, %1 : vector<1x512xf32>
    %c3 = arith.constant 3 : index
    %7 = memref.load %arg1[%c3] : memref<12xf32, #tpu.memory_space<smem>>
    %8 = vector.broadcast %7 : f32 to vector<1x512xf32>
    %9 = arith.mulf %8, %2 : vector<1x512xf32>
    %10 = arith.addf %6, %9 : vector<1x512xf32>
    %c6 = arith.constant 6 : index
    %11 = memref.load %arg1[%c6] : memref<12xf32, #tpu.memory_space<smem>>
    %12 = vector.broadcast %11 : f32 to vector<1x512xf32>
    %13 = arith.mulf %12, %3 : vector<1x512xf32>
    %14 = arith.addf %10, %13 : vector<1x512xf32>
    %c9 = arith.constant 9 : index
    %15 = memref.load %arg1[%c9] : memref<12xf32, #tpu.memory_space<smem>>
    %16 = vector.broadcast %15 : f32 to vector<1x512xf32>
    %17 = arith.addf %14, %16 : vector<1x512xf32>
    %c1 = arith.constant 1 : index
    %18 = memref.load %arg1[%c1] : memref<12xf32, #tpu.memory_space<smem>>
    %19 = vector.broadcast %18 : f32 to vector<1x512xf32>
    %20 = arith.mulf %19, %1 : vector<1x512xf32>
    %c4 = arith.constant 4 : index
    %21 = memref.load %arg1[%c4] : memref<12xf32, #tpu.memory_space<smem>>
    %22 = vector.broadcast %21 : f32 to vector<1x512xf32>
    %23 = arith.mulf %22, %2 : vector<1x512xf32>
    %24 = arith.addf %20, %23 : vector<1x512xf32>
    %c7 = arith.constant 7 : index
    %25 = memref.load %arg1[%c7] : memref<12xf32, #tpu.memory_space<smem>>
    %26 = vector.broadcast %25 : f32 to vector<1x512xf32>
    %27 = arith.mulf %26, %3 : vector<1x512xf32>
    %28 = arith.addf %24, %27 : vector<1x512xf32>
    %c10 = arith.constant 10 : index
    %29 = memref.load %arg1[%c10] : memref<12xf32, #tpu.memory_space<smem>>
    %30 = vector.broadcast %29 : f32 to vector<1x512xf32>
    %31 = arith.addf %28, %30 : vector<1x512xf32>
    %c2 = arith.constant 2 : index
    %32 = memref.load %arg1[%c2] : memref<12xf32, #tpu.memory_space<smem>>
    %33 = vector.broadcast %32 : f32 to vector<1x512xf32>
    %34 = arith.mulf %33, %1 : vector<1x512xf32>
    %c5 = arith.constant 5 : index
    %35 = memref.load %arg1[%c5] : memref<12xf32, #tpu.memory_space<smem>>
    %36 = vector.broadcast %35 : f32 to vector<1x512xf32>
    %37 = arith.mulf %36, %2 : vector<1x512xf32>
    %38 = arith.addf %34, %37 : vector<1x512xf32>
    %c8 = arith.constant 8 : index
    %39 = memref.load %arg1[%c8] : memref<12xf32, #tpu.memory_space<smem>>
    %40 = vector.broadcast %39 : f32 to vector<1x512xf32>
    %41 = arith.mulf %40, %3 : vector<1x512xf32>
    %42 = arith.addf %38, %41 : vector<1x512xf32>
    %c11 = arith.constant 11 : index
    %43 = memref.load %arg1[%c11] : memref<12xf32, #tpu.memory_space<smem>>
    %44 = vector.broadcast %43 : f32 to vector<1x512xf32>
    %45 = arith.addf %42, %44 : vector<1x512xf32>
    %46 = tpu.concatenate %17, %31, %45 in 0 : vector<1x512xf32>, vector<1x512xf32>, vector<1x512xf32> -> vector<3x512xf32>
    %c0_2 = arith.constant 0 : index
    %c0_3 = arith.constant 0 : index
    %47 = vector.load %arg3[%c0_2, %c0_3] : memref<3x512xf32, #tpu.memory_space<vmem>>, vector<3x512xf32>
    tpu.vector_store %arg3[%c0_2, %c0_3], %46 {strides = array<i32>} : memref<3x512xf32, #tpu.memory_space<vmem>>, vector<3x512xf32>,
    return
  }
  func.func @transform_0(%arg0: i32) -> i32 {
    %c0_i32 = arith.constant 0 : i32
    %c0_i32_0 = arith.constant 0 : i32
    return %c0_i32 : i32
  }
  func.func @transform_1(%arg0: i32) -> (i32, i32) {
    %c0_i32 = arith.constant 0 : i32
    %c0_i32_0 = arith.constant 0 : i32
    return %c0_i32, %arg0 : i32, i32
  }
  func.func @transform_2(%arg0: i32) -> (i32, i32) {
    %c0_i32 = arith.constant 0 : i32
    %c0_i32_0 = arith.constant 0 : i32
    return %c0_i32, %arg0 : i32, i32
  }
}

</mosaic_0001>

<llo_original>
// kernel: _forward_fused.1
$region0: #{_forward_fused.1}
  #allocation0 [shape = 'u32[]', space=smem, size = 0x4, offset = 0x4, fixed_abs, tag = 'smem constant byte address 0x4 - core index']
  #allocation1 [shape = 'u32[144,128]{1,0:T(1,128)}', space=vmem, size = 0x12000, scoped, tag = 'internal scratch']
  %s0 = inlined_call_operand.vmem [shape: f32[12], index: 0, kind: input, shape index: {}]
  %s1 = inlined_call_operand.vmem [shape: f32[3,512], index: 1, kind: input, shape index: {}]
  %s2 = inlined_call_operand.vmem [shape: f32[3,512], index: 2, kind: output, shape index: {}]
  %s3 = sld [smem:[#allocation0]]
  $region22: #{_forward_fused.1} parent=0
    _
  %s5 = ssub.s32 1, %s3
  %s6 = scalar_select 0, %s5, %s3
  $region1: #{_forward_fused.1} parent=0
    #allocation2 [shape = 'u8[512]{0}', space=smem, size = 0x200, scoped, tag = 'input window, operand 0, single buffered']
    #allocation3 [shape = 's32[1]{0}', space=sflag, size = 0x4, scoped, tag = 'scoped memory for _forward_fused.1']
    %7 = vsyncpa [#allocation3], 0
    // Predicated region
    $region2: #{_forward_fused.1} parent=1 // pred_check
      _
    $region3: #{_forward_fused.1} parent=1 // pred_check_branch
      %9 = sbr.rel (0) target = $region5
    $region4: #{_forward_fused.1} parent=1 // pred_region
      %s11 = ssub.s32 16, 16
      %12 = vsyncadd [#allocation3], %s11
      %s14 = sshll.u32 %s0, 4
      %s15 = int_to_ptr.vmem [resolvable:$true] %s14
      %17 = dma.vmem_to_smem %s15, 16, [#allocation2], [#allocation3]
    $region5: #{_forward_fused.1} parent=1 // pred_fallthru
      _
    // Predicated region
    $region6: #{_forward_fused.1} parent=1 // pred_check
      _
    $region7: #{_forward_fused.1} parent=1 // pred_check_branch
      %19 = sbr.rel (0) target = $region9
    $region8: #{_forward_fused.1} parent=1 // pred_region
      _
    $region9: #{_forward_fused.1} parent=1 // pred_fallthru
      _
    // Predicated region
    $region10: #{_forward_fused.1} parent=1 // pred_check
      _
    $region11: #{_forward_fused.1} parent=1 // pred_check_branch
      %21 = sbr.rel (0) target = $region13
    $region12: #{_forward_fused.1} parent=1 // pred_region
      %22 = dma.done [#allocation3], 16
    $region13: #{_forward_fused.1} parent=1 // pred_fallthru
      _
    %23 = sfence
    %v24 = vld [vmem:[%s1] sm:$0x77]
    %v25 = vld [vmem:[%s1 + $0x8] sm:$0x77]
    %s26 = sld [smem:[#allocation2]]
    %v27 = vstv %s26
    %v28 = vmul.f32 %v27, %v24
    %v29 = vmul.f32 %v27, %v25
    %s30 = sld [smem:[#allocation2 + $0x3]]
    %v31 = vstv %s30
    %v32 = vmul.f32 %v31, %v24
    %v33 = vmul.f32 %v31, %v25
    %v36 = vrot.slane %v32, 5
    %v37 = vrot.slane %v36, 4
    %v38 = vrot.slane %v33, 5
    %v39 = vrot.slane %v38, 4
    %v42 = vadd.f32 %v28, %v37
    %v43 = vadd.f32 %v29, %v39
    %s44 = sld [smem:[#allocation2 + $0x6]]
    %v45 = vstv %s44
    %v46 = vmul.f32 %v45, %v24
    %v47 = vmul.f32 %v45, %v25
    %v50 = vrot.slane %v46, 6
    %v51 = vrot.slane %v50, 4
    %v52 = vrot.slane %v47, 6
    %v53 = vrot.slane %v52, 4
    %v56 = vadd.f32 %v42, %v51
    %v57 = vadd.f32 %v43, %v53
    %s58 = sld [smem:[#allocation2 + $0x9]]
    %v59 = vstv %s58
    %v60 = vadd.f32 %v56, %v59
    %v61 = vadd.f32 %v57, %v59
    %s62 = sld [smem:[#allocation2 + $0x1]]
    %v63 = vstv %s62
    %v64 = vmul.f32 %v63, %v24
    %v65 = vmul.f32 %v63, %v25
    %s66 = sld [smem:[#allocation2 + $0x4]]
    %v67 = vstv %s66
    %v68 = vmul.f32 %v67, %v24
    %v69 = vmul.f32 %v67, %v25
    %v72 = vrot.slane %v68, 5
    %v73 = vrot.slane %v72, 4
    %v74 = vrot.slane %v69, 5
    %v75 = vrot.slane %v74, 4
    %v78 = vadd.f32 %v64, %v73
    %v79 = vadd.f32 %v65, %v75
    %s80 = sld [smem:[#allocation2 + $0x7]]
    %v81 = vstv %s80
    %v82 = vmul.f32 %v81, %v24
    %v83 = vmul.f32 %v81, %v25
    %v86 = vrot.slane %v82, 6
    %v87 = vrot.slane %v86, 4
    %v88 = vrot.slane %v83, 6
    %v89 = vrot.slane %v88, 4
    %v92 = vadd.f32 %v78, %v87
    %v93 = vadd.f32 %v79, %v89
    %s94 = sld [smem:[#allocation2 + $0xa]]
    %v95 = vstv %s94
    %v96 = vadd.f32 %v92, %v95
    %v97 = vadd.f32 %v93, %v95
    %s98 = sld [smem:[#allocation2 + $0x2]]
    %v99 = vstv %s98
    %v100 = vmul.f32 %v99, %v24
    %v101 = vmul.f32 %v99, %v25
    %s102 = sld [smem:[#allocation2 + $0x5]]
    %v103 = vstv %s102
    %v104 = vmul.f32 %v103, %v24
    %v105 = vmul.f32 %v103, %v25
    %v108 = vrot.slane %v104, 5
    %v109 = vrot.slane %v108, 4
    %v110 = vrot.slane %v105, 5
    %v111 = vrot.slane %v110, 4
    %v114 = vadd.f32 %v100, %v109
    %v115 = vadd.f32 %v101, %v111
    %s116 = sld [smem:[#allocation2 + $0x8]]
    %v117 = vstv %s116
    %v118 = vmul.f32 %v117, %v24
    %v119 = vmul.f32 %v117, %v25
    %v122 = vrot.slane %v118, 6
    %v123 = vrot.slane %v122, 4
    %v124 = vrot.slane %v119, 6
    %v125 = vrot.slane %v124, 4
    %v128 = vadd.f32 %v114, %v123
    %v129 = vadd.f32 %v115, %v125
    %s130 = sld [smem:[#allocation2 + $0xb]]
    %v131 = vstv %s130
    %v132 = vadd.f32 %v128, %v131
    %v133 = vadd.f32 %v129, %v131
    %v136 = vlaneseq
    %v137 = vshrl.u32 %v136, 7
    %v138 = vsub.s32 0, %v137
    %v139 = vrot.slane %v60, %v138
    %v140 = vlaneseq
    %v141 = vshrl.u32 %v140, 7
    %v142 = vsub.s32 4, %v141
    %v143 = vrot.slane %v60, %v142
    %v144 = vlaneseq
    %v145 = vshrl.u32 %v144, 7
    %v146 = vsub.s32 0, %v145
    %v147 = vrot.slane %v61, %v146
    %v148 = vlaneseq
    %v149 = vshrl.u32 %v148, 7
    %v150 = vsub.s32 4, %v149
    %v151 = vrot.slane %v61, %v150
    %v158 = vlaneseq
    %v159 = vshrl.u32 %v158, 7
    %v160 = vsub.s32 0, %v159
    %v161 = vrot.slane %v96, %v160
    %v162 = vlaneseq
    %v163 = vshrl.u32 %v162, 7
    %v164 = vsub.s32 4, %v163
    %v165 = vrot.slane %v96, %v164
    %v166 = vlaneseq
    %v167 = vshrl.u32 %v166, 7
    %v168 = vsub.s32 0, %v167
    %v169 = vrot.slane %v97, %v168
    %v170 = vlaneseq
    %v171 = vshrl.u32 %v170, 7
    %v172 = vsub.s32 4, %v171
    %v173 = vrot.slane %v97, %v172
    %v180 = vlaneseq
    %v181 = vshrl.u32 %v180, 7
    %v182 = vsub.s32 0, %v181
    %v183 = vrot.slane %v132, %v182
    %v184 = vlaneseq
    %v185 = vshrl.u32 %v184, 7
    %v186 = vsub.s32 4, %v185
    %v187 = vrot.slane %v132, %v186
    %v188 = vlaneseq
    %v189 = vshrl.u32 %v188, 7
    %v190 = vsub.s32 0, %v189
    %v191 = vrot.slane %v133, %v190
    %v192 = vlaneseq
    %v193 = vshrl.u32 %v192, 7
    %v194 = vsub.s32 4, %v193
    %v195 = vrot.slane %v133, %v194
    %vm200 = vcmask 1040384
    %v201 = vsel %vm200, %v139, %v161
    %v202 = vsel %vm200, %v143, %v165
    %v203 = vsel %vm200, %v147, %v169
    %v204 = vsel %vm200, %v151, %v173
    %vm205 = vcmask 1041408
    %v206 = vsel %vm205, %v201, %v183
    %v207 = vsel %vm205, %v202, %v187
    %v208 = vsel %vm205, %v203, %v191
    %v209 = vsel %vm205, %v204, %v195
    %v214 = vcombine.low %v206, %v207
    %v215 = vcombine.low %v208, %v209
    %218 = vst [vmem:[%s2] sm:$0x77] %v214
    %219 = vst [vmem:[%s2 + $0x8] sm:$0x77] %v215
    // Predicated region
    $region14: #{_forward_fused.1} parent=1 // pred_check
      _
    $region15: #{_forward_fused.1} parent=1 // pred_check_branch
      %221 = sbr.rel (0) target = $region17
    $region16: #{_forward_fused.1} parent=1 // pred_region
      _
    $region17: #{_forward_fused.1} parent=1 // pred_fallthru
      _
    // Predicated region
    $region18: #{_forward_fused.1} parent=1 // pred_check
      _
    $region19: #{_forward_fused.1} parent=1 // pred_check_branch
      %223 = sbr.rel (0) target = $region21
    $region20: #{_forward_fused.1} parent=1 // pred_region
      _
    $region21: #{_forward_fused.1} parent=1 // pred_fallthru
      _
    %224 = vsyncpa [#allocation3], 1

</llo_original>
